<compile_context>
chip_gen: v7x
topology: tpu7x:2x2x1
jax: 0.10.0
libtpu: 0.0.40
codegen_flags: <defaults>
</compile_context>

<pallas_src>
import functools

import jax
import jax.numpy as jnp
from jax.experimental import pallas as pl
from jax.experimental.pallas import tpu as pltpu


def _round_up(x: int, m: int) -> int:
    return ((x + m - 1) // m) * m


def dqn_kernel(x_ref, w1_ref, b1_ref, w2_ref, b2_ref, w3_ref, b3_ref, o_ref):
    # Feature-major tiles:
    #   x_ref : (state_size, TB)  bf16
    #   w*    : (out, in)         bf16   (native PyTorch Linear layout)
    #   b*    : (out, 1)          f32    (broadcast over lanes)
    #   o_ref : (action_size, TB) f32
    x = x_ref[...]

    # Layer 1: bf16 MXU matmul, f32 accumulate; bias + ReLU in f32 on the VPU.
    h1 = jnp.dot(w1_ref[...], x, preferred_element_type=jnp.float32)
    h1 = jnp.maximum(h1 + b1_ref[...], 0.0).astype(jnp.bfloat16)

    # Layer 2
    h2 = jnp.dot(w2_ref[...], h1, preferred_element_type=jnp.float32)
    h2 = jnp.maximum(h2 + b2_ref[...], 0.0).astype(jnp.bfloat16)

    # Layer 3 (no activation)
    out = jnp.dot(w3_ref[...], h2, preferred_element_type=jnp.float32) + b3_ref[...]
    o_ref[...] = out.astype(o_ref.dtype)


def _pick_batch_tile(batch: int, block_b: int) -> int:
    """Batch (lane-axis) tile. Full-extent single block for tiny batches;
    otherwise a multiple of 128 giving >= 2 grid steps (v7x megacore)."""
    if batch <= 128:
        return batch  # minor block dim == full array dim -> always legal
    return min(block_b, _round_up(-(-batch // 2), 128))


@functools.partial(jax.jit, static_argnames=("block_b",))
def dqn_forward(x, w1, b1, w2, b2, w3, b3, *, block_b=2048):
    """DQN forward.  x: (B, state_size) f32.  Weights (out, in) [PyTorch
    layout], biases (out, 1).  Returns (B, action_size) f32."""
    B, state_size = x.shape
    kernel_dim = w1.shape[0]
    action_size = w3.shape[0]

    tb = _pick_batch_tile(B, block_b)
    grid = (pl.cdiv(B, tb),)

    # One fused relayout+cast pass over x (no separate cast / pad passes).
    xT = x.T.astype(jnp.bfloat16)              # (state_size, B)
    w1 = w1.astype(jnp.bfloat16)
    w2 = w2.astype(jnp.bfloat16)
    w3 = w3.astype(jnp.bfloat16)
    b1 = b1.astype(jnp.float32)
    b2 = b2.astype(jnp.float32)
    b3 = b3.astype(jnp.float32)

    # Weights/biases: constant index_map -> VMEM-resident across grid steps.
    const = lambda i: (0, 0)

    outT = pl.pallas_call(
        dqn_kernel,
        out_shape=jax.ShapeDtypeStruct((action_size, B), jnp.float32),
        grid=grid,
        in_specs=[
            pl.BlockSpec((state_size, tb), lambda i: (0, i)),    # x^T tile
            pl.BlockSpec((kernel_dim, state_size), const),       # w1
            pl.BlockSpec((kernel_dim, 1), const),                # b1
            pl.BlockSpec((kernel_dim, kernel_dim), const),       # w2
            pl.BlockSpec((kernel_dim, 1), const),                # b2
            pl.BlockSpec((action_size, kernel_dim), const),      # w3
            pl.BlockSpec((action_size, 1), const),               # b3
        ],
        out_specs=pl.BlockSpec((action_size, tb), lambda i: (0, i)),
        compiler_params=pltpu.CompilerParams(
            dimension_semantics=("parallel",),
        ),
    )(xT, w1, b1, w2, b2, w3, b3)

    return outT.T                               # (B, action_size) f32


def init_dqn_params(key, state_size, action_size, kernel_dim=64):
    """Kaiming-normal (fan_in, relu) weights, zero biases, as in the PyTorch
    module.  Weights in PyTorch layout (out_features, in_features); biases
    stored as (out_features, 1) columns."""
    k1, k2, k3 = jax.random.split(key, 3)

    def kaiming(k, fan_out, fan_in):
        std = jnp.sqrt(2.0 / fan_in)
        return jax.random.normal(k, (fan_out, fan_in), dtype=jnp.float32) * std

    w1 = kaiming(k1, kernel_dim, state_size)
    b1 = jnp.zeros((kernel_dim, 1), dtype=jnp.float32)
    w2 = kaiming(k2, kernel_dim, kernel_dim)
    b2 = jnp.zeros((kernel_dim, 1), dtype=jnp.float32)
    w3 = kaiming(k3, action_size, kernel_dim)
    b3 = jnp.zeros((action_size, 1), dtype=jnp.float32)
    return w1, b1, w2, b2, w3, b3


def reference_forward_bf16(x, w1, b1, w2, b2, w3, b3):
    """Reference emulating the kernel's bf16-operand / f32-accumulate math."""
    bf = jnp.bfloat16
    xT = x.T.astype(bf)
    h1 = jnp.dot(w1.astype(bf), xT, preferred_element_type=jnp.float32)
    h1 = jnp.maximum(h1 + b1, 0.0).astype(bf)
    h2 = jnp.dot(w2.astype(bf), h1, preferred_element_type=jnp.float32)
    h2 = jnp.maximum(h2 + b2, 0.0).astype(bf)
    out = jnp.dot(w3.astype(bf), h2, preferred_element_type=jnp.float32) + b3
    return out.T


def reference_forward_f32(x, w1, b1, w2, b2, w3, b3):
    h1 = jnp.maximum(x @ w1.T + b1.T, 0.0)
    h2 = jnp.maximum(h1 @ w2.T + b2.T, 0.0)
    return h2 @ w3.T + b3.T


if __name__ == "__main__":
    key = jax.random.PRNGKey(0)
    k_x, k_x2, k_p = jax.random.split(key, 3)

    state_size = 16
    action_size = 4
    kernel_dim = 64
    params = init_dqn_params(k_p, state_size, action_size, kernel_dim)

    # Small batch: single full-extent block (grid of 1).
    batch = 8
    x = jax.random.normal(k_x, (batch, state_size), dtype=jnp.float32)
    out = jax.block_until_ready(dqn_forward(x, *params))
    assert out.shape == (batch, action_size), out.shape
    assert jnp.allclose(out, reference_forward_bf16(x, *params),
                        atol=2e-2, rtol=2e-2), "mismatch vs bf16-emulated ref"
    assert jnp.allclose(out, reference_forward_f32(x, *params),
                        atol=5e-2, rtol=5e-2), "mismatch vs f32 reference"

    # Larger ragged batch: exercises the multi-step pipelined grid and the
    # clipped (non-divisible) last block.
    batch2 = 300
    x2 = jax.random.normal(k_x2, (batch2, state_size), dtype=jnp.float32)
    out2 = jax.block_until_ready(dqn_forward(x2, *params))
    assert out2.shape == (batch2, action_size), out2.shape
    assert jnp.allclose(out2, reference_forward_bf16(x2, *params),
                        atol=2e-2, rtol=2e-2), "mismatch vs bf16-emulated ref (B=300)"
    assert jnp.allclose(out2, reference_forward_f32(x2, *params),
                        atol=5e-2, rtol=5e-2), "mismatch vs f32 reference (B=300)"

    print("KERNEL_OK")
</pallas_src>

<mosaic_0001>
module attributes {stable_mosaic.version = 11 : i64} {
  func.func @dqn_kernel(%arg0: i32, %arg1: memref<16x8xbf16, #tpu.memory_space<vmem>>, %arg2: memref<64x16xbf16, #tpu.memory_space<vmem>>, %arg3: memref<64x1xf32, #tpu.memory_space<vmem>>, %arg4: memref<64x64xbf16, #tpu.memory_space<vmem>>, %arg5: memref<64x1xf32, #tpu.memory_space<vmem>>, %arg6: memref<4x64xbf16, #tpu.memory_space<vmem>>, %arg7: memref<4x1xf32, #tpu.memory_space<vmem>>, %arg8: memref<4x8xf32, #tpu.memory_space<vmem>>) attributes {dimension_semantics = [#tpu.dimension_semantics<parallel>], iteration_bounds = array<i64: 1>, scalar_prefetch = 0 : i64, scratch_operands = 0 : i64, tpu.core_type = #tpu.core_type<tc>, window_params = [{transform_indices = @transform_0, window_bounds = array<i64: 16, 8>}, {pipeline_mode = #tpu.pipeline_mode<synchronous>, transform_indices = @transform_1, window_bounds = array<i64: 64, 16>}, {pipeline_mode = #tpu.pipeline_mode<synchronous>, transform_indices = @transform_2, window_bounds = array<i64: 64, 1>}, {pipeline_mode = #tpu.pipeline_mode<synchronous>, transform_indices = @transform_3, window_bounds = array<i64: 64, 64>}, {pipeline_mode = #tpu.pipeline_mode<synchronous>, transform_indices = @transform_4, window_bounds = array<i64: 64, 1>}, {pipeline_mode = #tpu.pipeline_mode<synchronous>, transform_indices = @transform_5, window_bounds = array<i64: 4, 64>}, {pipeline_mode = #tpu.pipeline_mode<synchronous>, transform_indices = @transform_6, window_bounds = array<i64: 4, 1>}, {transform_indices = @transform_7, window_bounds = array<i64: 4, 8>}]} {
    %c0 = arith.constant 0 : index
    %c0_0 = arith.constant 0 : index
    %0 = vector.load %arg1[%c0, %c0_0] : memref<16x8xbf16, #tpu.memory_space<vmem>>, vector<16x8xbf16>
    %c0_1 = arith.constant 0 : index
    %c0_2 = arith.constant 0 : index
    %1 = vector.load %arg2[%c0_1, %c0_2] : memref<64x16xbf16, #tpu.memory_space<vmem>>, vector<64x16xbf16>
    %cst = arith.constant dense<0.000000e+00> : vector<64x8xf32>
    %2 = tpu.matmul %1, %0, %cst {dimension_numbers = #tpu.dot_dimension_numbers<[1], [0], [0], [1], [0, 0, 1, 1], [], []>} : vector<64x16xbf16>, vector<16x8xbf16>, vector<64x8xf32> -> vector<64x8xf32>
    %c0_3 = arith.constant 0 : index
    %c0_4 = arith.constant 0 : index
    %3 = vector.load %arg3[%c0_3, %c0_4] : memref<64x1xf32, #tpu.memory_space<vmem>>, vector<64x1xf32>
    %4 = vector.broadcast %3 : vector<64x1xf32> to vector<64x8xf32>
    %5 = arith.addf %2, %4 : vector<64x8xf32>
    %cst_5 = arith.constant 0.000000e+00 : f32
    %6 = vector.broadcast %cst_5 : f32 to vector<64x8xf32>
    %7 = arith.maximumf %5, %6 : vector<64x8xf32>
    %8 = arith.truncf %7 : vector<64x8xf32> to vector<64x8xbf16>
    %c0_6 = arith.constant 0 : index
    %c0_7 = arith.constant 0 : index
    %9 = vector.load %arg4[%c0_6, %c0_7] : memref<64x64xbf16, #tpu.memory_space<vmem>>, vector<64x64xbf16>
    %cst_8 = arith.constant dense<0.000000e+00> : vector<64x8xf32>
    %10 = tpu.matmul %9, %8, %cst_8 {dimension_numbers = #tpu.dot_dimension_numbers<[1], [0], [0], [1], [0, 0, 1, 1], [], []>} : vector<64x64xbf16>, vector<64x8xbf16>, vector<64x8xf32> -> vector<64x8xf32>
    %c0_9 = arith.constant 0 : index
    %c0_10 = arith.constant 0 : index
    %11 = vector.load %arg5[%c0_9, %c0_10] : memref<64x1xf32, #tpu.memory_space<vmem>>, vector<64x1xf32>
    %12 = vector.broadcast %11 : vector<64x1xf32> to vector<64x8xf32>
    %13 = arith.addf %10, %12 : vector<64x8xf32>
    %cst_11 = arith.constant 0.000000e+00 : f32
    %14 = vector.broadcast %cst_11 : f32 to vector<64x8xf32>
    %15 = arith.maximumf %13, %14 : vector<64x8xf32>
    %16 = arith.truncf %15 : vector<64x8xf32> to vector<64x8xbf16>
    %c0_12 = arith.constant 0 : index
    %c0_13 = arith.constant 0 : index
    %17 = vector.load %arg6[%c0_12, %c0_13] : memref<4x64xbf16, #tpu.memory_space<vmem>>, vector<4x64xbf16>
    %cst_14 = arith.constant dense<0.000000e+00> : vector<4x8xf32>
    %18 = tpu.matmul %17, %16, %cst_14 {dimension_numbers = #tpu.dot_dimension_numbers<[1], [0], [0], [1], [0, 0, 1, 1], [], []>} : vector<4x64xbf16>, vector<64x8xbf16>, vector<4x8xf32> -> vector<4x8xf32>
    %c0_15 = arith.constant 0 : index
    %c0_16 = arith.constant 0 : index
    %19 = vector.load %arg7[%c0_15, %c0_16] : memref<4x1xf32, #tpu.memory_space<vmem>>, vector<4x1xf32>
    %20 = vector.broadcast %19 : vector<4x1xf32> to vector<4x8xf32>
    %21 = arith.addf %18, %20 : vector<4x8xf32>
    %c0_17 = arith.constant 0 : index
    %c0_18 = arith.constant 0 : index
    %22 = vector.load %arg8[%c0_17, %c0_18] : memref<4x8xf32, #tpu.memory_space<vmem>>, vector<4x8xf32>
    tpu.vector_store %arg8[%c0_17, %c0_18], %21 {strides = array<i32>} : memref<4x8xf32, #tpu.memory_space<vmem>>, vector<4x8xf32>,
    return
  }
  func.func @transform_0(%arg0: i32) -> (i32, i32) {
    %c0_i32 = arith.constant 0 : i32
    %c0_i32_0 = arith.constant 0 : i32
    return %c0_i32, %arg0 : i32, i32
  }
  func.func @transform_1(%arg0: i32) -> (i32, i32) {
    %c0_i32 = arith.constant 0 : i32
    %c0_i32_0 = arith.constant 0 : i32
    %c0_i32_1 = arith.constant 0 : i32
    return %c0_i32, %c0_i32_0 : i32, i32
  }
  func.func @transform_2(%arg0: i32) -> (i32, i32) {
    %c0_i32 = arith.constant 0 : i32
    %c0_i32_0 = arith.constant 0 : i32
    %c0_i32_1 = arith.constant 0 : i32
    return %c0_i32, %c0_i32_0 : i32, i32
  }
  func.func @transform_3(%arg0: i32) -> (i32, i32) {
    %c0_i32 = arith.constant 0 : i32
    %c0_i32_0 = arith.constant 0 : i32
    %c0_i32_1 = arith.constant 0 : i32
    return %c0_i32, %c0_i32_0 : i32, i32
  }
  func.func @transform_4(%arg0: i32) -> (i32, i32) {
    %c0_i32 = arith.constant 0 : i32
    %c0_i32_0 = arith.constant 0 : i32
    %c0_i32_1 = arith.constant 0 : i32
    return %c0_i32, %c0_i32_0 : i32, i32
  }
  func.func @transform_5(%arg0: i32) -> (i32, i32) {
    %c0_i32 = arith.constant 0 : i32
    %c0_i32_0 = arith.constant 0 : i32
    %c0_i32_1 = arith.constant 0 : i32
    return %c0_i32, %c0_i32_0 : i32, i32
  }
  func.func @transform_6(%arg0: i32) -> (i32, i32) {
    %c0_i32 = arith.constant 0 : i32
    %c0_i32_0 = arith.constant 0 : i32
    %c0_i32_1 = arith.constant 0 : i32
    return %c0_i32, %c0_i32_0 : i32, i32
  }
  func.func @transform_7(%arg0: i32) -> (i32, i32) {
    %c0_i32 = arith.constant 0 : i32
    %c0_i32_0 = arith.constant 0 : i32
    return %c0_i32, %arg0 : i32, i32
  }
}

</mosaic_0001>

<llo_original>
// kernel: dqn_forward.1
$region0: #{dqn_forward.1}
  #allocation0 [shape = 'u32[]', space=smem, size = 0x4, offset = 0x4, fixed_abs, tag = 'smem constant byte address 0x4 - core index']
  #allocation1 [shape = 'u32[144,128]{1,0:T(1,128)}', space=vmem, size = 0x12000, scoped, tag = 'internal scratch']
  %s0 = inlined_call_operand.vmem [shape: bf16[16,8], index: 0, kind: input, shape index: {}]
  %s1 = inlined_call_operand.vmem [shape: bf16[64,16], index: 1, kind: input, shape index: {}]
  %s2 = inlined_call_operand.vmem [shape: f32[64,1], index: 2, kind: input, shape index: {}]
  %s3 = inlined_call_operand.vmem [shape: bf16[64,64], index: 3, kind: input, shape index: {}]
  %s4 = inlined_call_operand.vmem [shape: f32[64,1], index: 4, kind: input, shape index: {}]
  %s5 = inlined_call_operand.vmem [shape: bf16[4,64], index: 5, kind: input, shape index: {}]
  %s6 = inlined_call_operand.vmem [shape: f32[4,1], index: 6, kind: input, shape index: {}]
  %s7 = inlined_call_operand.hbm [shape: f32[4,8], index: 7, kind: output, shape index: {}]
  %s8 = sld [smem:[#allocation0]]
  $region38: #{dqn_forward.1} parent=0
    _
  %s10 = ssub.s32 1, %s8
  %s11 = scalar_select 0, %s10, %s8
  $region1: #{dqn_forward.1} parent=0
    #allocation2 [shape = 'u8[2048]{0}', space=vmem, size = 0x800, scoped, tag = 'output window, operand 0, single buffered']
    #allocation3 [shape = 's32[1]{0}', space=sflag, size = 0x4, scoped, tag = 'scoped memory for dqn_forward.1']
    %12 = vsyncpa [#allocation3], 0
    // Predicated region
    $region2: #{dqn_forward.1} parent=1 // pred_check
      _
    $region3: #{dqn_forward.1} parent=1 // pred_check_branch
      %14 = sbr.rel (0) target = $region5
    $region4: #{dqn_forward.1} parent=1 // pred_region
      _
    $region5: #{dqn_forward.1} parent=1 // pred_fallthru
      _
    // Predicated region
    $region6: #{dqn_forward.1} parent=1 // pred_check
      _
    $region7: #{dqn_forward.1} parent=1 // pred_check_branch
      %16 = sbr.rel (0) target = $region9
    $region8: #{dqn_forward.1} parent=1 // pred_region
      _
    $region9: #{dqn_forward.1} parent=1 // pred_fallthru
      _
    // Predicated region
    $region10: #{dqn_forward.1} parent=1 // pred_check
      _
    $region11: #{dqn_forward.1} parent=1 // pred_check_branch
      %18 = sbr.rel (0) target = $region13
    $region12: #{dqn_forward.1} parent=1 // pred_region
      _
    $region13: #{dqn_forward.1} parent=1 // pred_fallthru
      _
    // Predicated region
    $region14: #{dqn_forward.1} parent=1 // pred_check
      _
    $region15: #{dqn_forward.1} parent=1 // pred_check_branch
      %20 = sbr.rel (0) target = $region17
    $region16: #{dqn_forward.1} parent=1 // pred_region
      _
    $region17: #{dqn_forward.1} parent=1 // pred_fallthru
      _
    // Predicated region
    $region18: #{dqn_forward.1} parent=1 // pred_check
      _
    $region19: #{dqn_forward.1} parent=1 // pred_check_branch
      %22 = sbr.rel (0) target = $region21
    $region20: #{dqn_forward.1} parent=1 // pred_region
      _
    $region21: #{dqn_forward.1} parent=1 // pred_fallthru
      _
    // Predicated region
    $region22: #{dqn_forward.1} parent=1 // pred_check
      _
    $region23: #{dqn_forward.1} parent=1 // pred_check_branch
      %24 = sbr.rel (0) target = $region25
    $region24: #{dqn_forward.1} parent=1 // pred_region
      _
    $region25: #{dqn_forward.1} parent=1 // pred_fallthru
      _
    // Predicated region
    $region26: #{dqn_forward.1} parent=1 // pred_check
      _
    $region27: #{dqn_forward.1} parent=1 // pred_check_branch
      %26 = sbr.rel (0) target = $region29
    $region28: #{dqn_forward.1} parent=1 // pred_region
      _
    $region29: #{dqn_forward.1} parent=1 // pred_fallthru
      _
    %v28 = vld [vmem:[%s0] sm:$0xf]
    %v29 = vld [vmem:[%s0 + $0x4] sm:$0xf]
    %v30 = vld [vmem:[%s1] sm:$0xf]
    %v31 = vld [vmem:[%s1 + $0x4] sm:$0xf]
    %v32 = vld [vmem:[%s1 + $0x8] sm:$0xf]
    %v33 = vld [vmem:[%s1 + $0xc] sm:$0xf]
    %v34 = vld [vmem:[%s1 + $0x10] sm:$0xf]
    %v35 = vld [vmem:[%s1 + $0x14] sm:$0xf]
    %v36 = vld [vmem:[%s1 + $0x18] sm:$0xf]
    %v37 = vld [vmem:[%s1 + $0x1c] sm:$0xf]
    %v38 = vld [vmem:[%s2] sm:$0xff]
    %v39 = vld [vmem:[%s2 + $0x8] sm:$0xff]
    %v40 = vld [vmem:[%s2 + $0x10] sm:$0xff]
    %v41 = vld [vmem:[%s2 + $0x18] sm:$0xff]
    %v42 = vld [vmem:[%s2 + $0x20] sm:$0xff]
    %v43 = vld [vmem:[%s2 + $0x28] sm:$0xff]
    %v44 = vld [vmem:[%s2 + $0x30] sm:$0xff]
    %v45 = vld [vmem:[%s2 + $0x38] sm:$0xff]
    %47 = vset.pattern.permute.xlu0 0
    %48 = vperm.xlu0 %47, %v38
    %v49 = vpop.permute.xlu0 %48
    %52 = vset.pattern.permute.xlu0 0
    %53 = vperm.xlu0 %52, %v39
    %v54 = vpop.permute.xlu0 %53
    %57 = vset.pattern.permute.xlu0 0
    %58 = vperm.xlu0 %57, %v40
    %v59 = vpop.permute.xlu0 %58
    %62 = vset.pattern.permute.xlu0 0
    %63 = vperm.xlu0 %62, %v41
    %v64 = vpop.permute.xlu0 %63
    %67 = vset.pattern.permute.xlu0 0
    %68 = vperm.xlu0 %67, %v42
    %v69 = vpop.permute.xlu0 %68
    %72 = vset.pattern.permute.xlu0 0
    %73 = vperm.xlu0 %72, %v43
    %v74 = vpop.permute.xlu0 %73
    %77 = vset.pattern.permute.xlu0 0
    %78 = vperm.xlu0 %77, %v44
    %v79 = vpop.permute.xlu0 %78
    %82 = vset.pattern.permute.xlu0 0
    %83 = vperm.xlu0 %82, %v45
    %v84 = vpop.permute.xlu0 %83
    %v94 = vunpack.c.l.b16 %v30
    %v95 = vunpack.c.l.b16 %v31
    %v96 = vunpack.c.l.b16 %v32
    %v97 = vunpack.c.l.b16 %v33
    %v98 = vunpack.c.l.b16 %v34
    %v99 = vunpack.c.l.b16 %v35
    %v100 = vunpack.c.l.b16 %v36
    %v101 = vunpack.c.l.b16 %v37
    %v102 = vpack.c.b16 %v95, %v94
    %v103 = vpack.c.b16 %v97, %v96
    %v104 = vpack.c.b16 %v99, %v98
    %v105 = vpack.c.b16 %v101, %v100
    %v108 = vunpack.c.l.b16 %v28
    %v109 = vunpack.c.l.b16 %v29
    %v110 = vpack.c.b16 %v109, %v108
    %vm112 = vcmask 130048
    %v114 = vsel %vm112, %v102, 0
    %v117 = vsel %vm112, %v103, 0
    %v120 = vsel %vm112, %v104, 0
    %v123 = vsel %vm112, %v105, 0
    %125 = vmatprep.subr.bf16.mxu0 0
    %126 = vmatpush1.bf16.msra.mxu0 %v110
    %127 = vmatprep.subr.bf16.mxu0 0
    %128 = vmatpush1.bf16.msra.mxu0 0
    %129 = vmatprep.subr.bf16.mxu0 0
    %130 = vmatpush1.bf16.msra.mxu0 0
    %131 = vmatprep.subr.bf16.mxu0 0
    %132 = vmatpush1.bf16.msra.mxu0 0
    %133 = vmatprep.subr.bf16.mxu0 0
    %134 = vmatpush1.bf16.msra.mxu0 0
    %135 = vmatprep.subr.bf16.mxu0 0
    %136 = vmatpush1.bf16.msra.mxu0 0
    %137 = vmatprep.subr.bf16.mxu0 0
    %138 = vmatpush1.bf16.msra.mxu0 0
    %139 = vmatprep.subr.bf16.mxu0 0
    %140 = vmatpush1.bf16.msra.mxu0 0
    %141 = vmatprep.subr.bf16.mxu0 0
    %142 = vmatpush1.bf16.msra.mxu0 0
    %143 = vmatprep.subr.bf16.mxu0 0
    %144 = vmatpush1.bf16.msra.mxu0 0
    %145 = vmatprep.subr.bf16.mxu0 0
    %146 = vmatpush1.bf16.msra.mxu0 0
    %147 = vmatprep.subr.bf16.mxu0 0
    %148 = vmatpush1.bf16.msra.mxu0 0
    %149 = vmatprep.subr.bf16.mxu0 0
    %150 = vmatpush1.bf16.msra.mxu0 0
    %151 = vmatprep.subr.bf16.mxu0 0
    %152 = vmatpush1.bf16.msra.mxu0 0
    %153 = vmatprep.subr.bf16.mxu0 0
    %154 = vmatpush1.bf16.msra.mxu0 0
    %155 = vmatprep.subr.bf16.mxu0 0
    %156 = vmatpush1.bf16.msra.mxu0 0
    %157 = vmatprep.mubr.bf16.mxu0 0
    %158 = vmatmul.mubr.bf16.gmra.mrb[0].mxu0 %v114
    %v159 = vpop.f32.mrb[0].mxu0
    %v160 = vadd.f32 %v49, %v159
    %v161 = vpop.f32.mrb[0].mxu0
    %v162 = vpop.f32.mrb[0].mxu0
    %v163 = vadd.f32 %v54, %v162
    %v164 = vpop.f32.mrb[0].mxu0
    %165 = vmatprep.mubr.bf16.mxu0 0
    %166 = vmatmul.mubr.bf16.gmra.mrb[0].mxu0 %v117
    %v167 = vpop.f32.mrb[0].mxu0
    %v168 = vadd.f32 %v59, %v167
    %v169 = vpop.f32.mrb[0].mxu0
    %v170 = vpop.f32.mrb[0].mxu0
    %v171 = vadd.f32 %v64, %v170
    %v172 = vpop.f32.mrb[0].mxu0
    %173 = vmatprep.mubr.bf16.mxu0 0
    %174 = vmatmul.mubr.bf16.gmra.mrb[0].mxu0 %v120
    %v175 = vpop.f32.mrb[0].mxu0
    %v176 = vadd.f32 %v69, %v175
    %v177 = vpop.f32.mrb[0].mxu0
    %v178 = vpop.f32.mrb[0].mxu0
    %v179 = vadd.f32 %v74, %v178
    %v180 = vpop.f32.mrb[0].mxu0
    %181 = vmatprep.mubr.bf16.mxu0 0
    %182 = vmatmul.mubr.bf16.gmra.mrb[0].mxu0 %v123
    %v183 = vpop.f32.mrb[0].mxu0
    %v184 = vadd.f32 %v79, %v183
    %v185 = vpop.f32.mrb[0].mxu0
    %v186 = vpop.f32.mrb[0].mxu0
    %v187 = vadd.f32 %v84, %v186
    %v188 = vpop.f32.mrb[0].mxu0
    %189 = vdwg.mxu0
    %v190 = vmax.f32 %v160, 0.0
    %v191 = vmax.f32 %v163, 0.0
    %v192 = vmax.f32 %v168, 0.0
    %v193 = vmax.f32 %v171, 0.0
    %v194 = vmax.f32 %v176, 0.0
    %v195 = vmax.f32 %v179, 0.0
    %v196 = vmax.f32 %v184, 0.0
    %v197 = vmax.f32 %v187, 0.0
    %v198 = vpack.c.bf16 %v191, %v190
    %v199 = vpack.c.bf16 %v193, %v192
    %v200 = vpack.c.bf16 %v195, %v194
    %v201 = vpack.c.bf16 %v197, %v196
    %v202 = vld [vmem:[%s3] sm:$0xf]
    %v203 = vld [vmem:[%s3 + $0x4] sm:$0xf]
    %v204 = vld [vmem:[%s3 + $0x8] sm:$0xf]
    %v205 = vld [vmem:[%s3 + $0xc] sm:$0xf]
    %v206 = vld [vmem:[%s3 + $0x10] sm:$0xf]
    %v207 = vld [vmem:[%s3 + $0x14] sm:$0xf]
    %v208 = vld [vmem:[%s3 + $0x18] sm:$0xf]
    %v209 = vld [vmem:[%s3 + $0x1c] sm:$0xf]
    %v210 = vld [vmem:[%s4] sm:$0xff]
    %v211 = vld [vmem:[%s4 + $0x8] sm:$0xff]
    %v212 = vld [vmem:[%s4 + $0x10] sm:$0xff]
    %v213 = vld [vmem:[%s4 + $0x18] sm:$0xff]
    %v214 = vld [vmem:[%s4 + $0x20] sm:$0xff]
    %v215 = vld [vmem:[%s4 + $0x28] sm:$0xff]
    %v216 = vld [vmem:[%s4 + $0x30] sm:$0xff]
    %v217 = vld [vmem:[%s4 + $0x38] sm:$0xff]
    %219 = vset.pattern.permute.xlu0 0
    %220 = vperm.xlu0 %219, %v210
    %v221 = vpop.permute.xlu0 %220
    %224 = vset.pattern.permute.xlu0 0
    %225 = vperm.xlu0 %224, %v211
    %v226 = vpop.permute.xlu0 %225
    %229 = vset.pattern.permute.xlu0 0
    %230 = vperm.xlu0 %229, %v212
    %v231 = vpop.permute.xlu0 %230
    %234 = vset.pattern.permute.xlu0 0
    %235 = vperm.xlu0 %234, %v213
    %v236 = vpop.permute.xlu0 %235
    %239 = vset.pattern.permute.xlu0 0
    %240 = vperm.xlu0 %239, %v214
    %v241 = vpop.permute.xlu0 %240
    %244 = vset.pattern.permute.xlu0 0
    %245 = vperm.xlu0 %244, %v215
    %v246 = vpop.permute.xlu0 %245
    %249 = vset.pattern.permute.xlu0 0
    %250 = vperm.xlu0 %249, %v216
    %v251 = vpop.permute.xlu0 %250
    %254 = vset.pattern.permute.xlu0 0
    %255 = vperm.xlu0 %254, %v217
    %v256 = vpop.permute.xlu0 %255
    %v266 = vunpack.c.l.b16 %v202
    %v267 = vunpack.c.l.b16 %v203
    %v268 = vunpack.c.l.b16 %v204
    %v269 = vunpack.c.l.b16 %v205
    %v270 = vunpack.c.l.b16 %v206
    %v271 = vunpack.c.l.b16 %v207
    %v272 = vunpack.c.l.b16 %v208
    %v273 = vunpack.c.l.b16 %v209
    %v274 = vpack.c.b16 %v267, %v266
    %v275 = vpack.c.b16 %v269, %v268
    %v276 = vpack.c.b16 %v271, %v270
    %v277 = vpack.c.b16 %v273, %v272
    %vm278 = vcmask 523264
    %v280 = vsel %vm278, %v274, 0
    %v283 = vsel %vm278, %v275, 0
    %v286 = vsel %vm278, %v276, 0
    %v289 = vsel %vm278, %v277, 0
    %291 = vmatprep.subr.bf16.mxu0 0
    %292 = vmatpush1.bf16.msra.mxu0 %v198
    %293 = vmatprep.subr.bf16.mxu0 0
    %294 = vmatpush1.bf16.msra.mxu0 %v199
    %295 = vmatprep.subr.bf16.mxu0 0
    %296 = vmatpush1.bf16.msra.mxu0 %v200
    %297 = vmatprep.subr.bf16.mxu0 0
    %298 = vmatpush1.bf16.msra.mxu0 %v201
    %299 = vmatprep.subr.bf16.mxu0 0
    %300 = vmatpush1.bf16.msra.mxu0 0
    %301 = vmatprep.subr.bf16.mxu0 0
    %302 = vmatpush1.bf16.msra.mxu0 0
    %303 = vmatprep.subr.bf16.mxu0 0
    %304 = vmatpush1.bf16.msra.mxu0 0
    %305 = vmatprep.subr.bf16.mxu0 0
    %306 = vmatpush1.bf16.msra.mxu0 0
    %307 = vmatprep.subr.bf16.mxu0 0
    %308 = vmatpush1.bf16.msra.mxu0 0
    %309 = vmatprep.subr.bf16.mxu0 0
    %310 = vmatpush1.bf16.msra.mxu0 0
    %311 = vmatprep.subr.bf16.mxu0 0
    %312 = vmatpush1.bf16.msra.mxu0 0
    %313 = vmatprep.subr.bf16.mxu0 0
    %314 = vmatpush1.bf16.msra.mxu0 0
    %315 = vmatprep.subr.bf16.mxu0 0
    %316 = vmatpush1.bf16.msra.mxu0 0
    %317 = vmatprep.subr.bf16.mxu0 0
    %318 = vmatpush1.bf16.msra.mxu0 0
    %319 = vmatprep.subr.bf16.mxu0 0
    %320 = vmatpush1.bf16.msra.mxu0 0
    %321 = vmatprep.subr.bf16.mxu0 0
    %322 = vmatpush1.bf16.msra.mxu0 0
    %323 = vmatprep.mubr.bf16.mxu0 0
    %324 = vmatmul.mubr.bf16.gmra.mrb[0].mxu0 %v280
    %v325 = vpop.f32.mrb[0].mxu0
    %v326 = vadd.f32 %v221, %v325
    %v327 = vpop.f32.mrb[0].mxu0
    %v328 = vpop.f32.mrb[0].mxu0
    %v329 = vadd.f32 %v226, %v328
    %v330 = vpop.f32.mrb[0].mxu0
    %331 = vmatprep.mubr.bf16.mxu0 0
    %332 = vmatmul.mubr.bf16.gmra.mrb[0].mxu0 %v283
    %v333 = vpop.f32.mrb[0].mxu0
    %v334 = vadd.f32 %v231, %v333
    %v335 = vpop.f32.mrb[0].mxu0
    %v336 = vpop.f32.mrb[0].mxu0
    %v337 = vadd.f32 %v236, %v336
    %v338 = vpop.f32.mrb[0].mxu0
    %339 = vmatprep.mubr.bf16.mxu0 0
    %340 = vmatmul.mubr.bf16.gmra.mrb[0].mxu0 %v286
    %v341 = vpop.f32.mrb[0].mxu0
    %v342 = vadd.f32 %v241, %v341
    %v343 = vpop.f32.mrb[0].mxu0
    %v344 = vpop.f32.mrb[0].mxu0
    %v345 = vadd.f32 %v246, %v344
    %v346 = vpop.f32.mrb[0].mxu0
    %347 = vmatprep.mubr.bf16.mxu0 0
    %348 = vmatmul.mubr.bf16.gmra.mrb[0].mxu0 %v289
    %v349 = vpop.f32.mrb[0].mxu0
    %v350 = vadd.f32 %v251, %v349
    %v351 = vpop.f32.mrb[0].mxu0
    %v352 = vpop.f32.mrb[0].mxu0
    %v353 = vadd.f32 %v256, %v352
    %v354 = vpop.f32.mrb[0].mxu0
    %355 = vdwg.mxu0
    %v356 = vmax.f32 %v326, 0.0
    %v357 = vmax.f32 %v329, 0.0
    %v358 = vmax.f32 %v334, 0.0
    %v359 = vmax.f32 %v337, 0.0
    %v360 = vmax.f32 %v342, 0.0
    %v361 = vmax.f32 %v345, 0.0
    %v362 = vmax.f32 %v350, 0.0
    %v363 = vmax.f32 %v353, 0.0
    %v364 = vpack.c.bf16 %v357, %v356
    %v365 = vpack.c.bf16 %v359, %v358
    %v366 = vpack.c.bf16 %v361, %v360
    %v367 = vpack.c.bf16 %v363, %v362
    %v368 = vld [vmem:[%s5] sm:$0x3]
    %v369 = vld [vmem:[%s6] sm:$0xf]
    %371 = vset.pattern.permute.xlu0 0
    %372 = vperm.xlu0 %371, %v369
    %v373 = vpop.permute.xlu0 %372
    %v376 = vsel %vm278, %v368, 0
    %378 = vmatprep.subr.bf16.mxu0 0
    %379 = vmatpush1.bf16.msra.mxu0 %v364
    %380 = vmatprep.subr.bf16.mxu0 0
    %381 = vmatpush1.bf16.msra.mxu0 %v365
    %382 = vmatprep.subr.bf16.mxu0 0
    %383 = vmatpush1.bf16.msra.mxu0 %v366
    %384 = vmatprep.subr.bf16.mxu0 0
    %385 = vmatpush1.bf16.msra.mxu0 %v367
    %386 = vmatprep.subr.bf16.mxu0 0
    %387 = vmatpush1.bf16.msra.mxu0 0
    %388 = vmatprep.subr.bf16.mxu0 0
    %389 = vmatpush1.bf16.msra.mxu0 0
    %390 = vmatprep.subr.bf16.mxu0 0
    %391 = vmatpush1.bf16.msra.mxu0 0
    %392 = vmatprep.subr.bf16.mxu0 0
    %393 = vmatpush1.bf16.msra.mxu0 0
    %394 = vmatprep.subr.bf16.mxu0 0
    %395 = vmatpush1.bf16.msra.mxu0 0
    %396 = vmatprep.subr.bf16.mxu0 0
    %397 = vmatpush1.bf16.msra.mxu0 0
    %398 = vmatprep.subr.bf16.mxu0 0
    %399 = vmatpush1.bf16.msra.mxu0 0
    %400 = vmatprep.subr.bf16.mxu0 0
    %401 = vmatpush1.bf16.msra.mxu0 0
    %402 = vmatprep.subr.bf16.mxu0 0
    %403 = vmatpush1.bf16.msra.mxu0 0
    %404 = vmatprep.subr.bf16.mxu0 0
    %405 = vmatpush1.bf16.msra.mxu0 0
    %406 = vmatprep.subr.bf16.mxu0 0
    %407 = vmatpush1.bf16.msra.mxu0 0
    %408 = vmatprep.subr.bf16.mxu0 0
    %409 = vmatpush1.bf16.msra.mxu0 0
    %410 = vmatprep.mubr.bf16.mxu0 0
    %411 = vmatmul.mubr.bf16.gmra.mrb[0].mxu0 %v376
    %v412 = vpop.f32.mrb[0].mxu0
    %v413 = vadd.f32 %v373, %v412
    %v414 = vpop.f32.mrb[0].mxu0
    %v415 = vpop.f32.mrb[0].mxu0
    %v416 = vpop.f32.mrb[0].mxu0
    %417 = vdwg.mxu0
    %vm418 = vcmask 60416
    %419 = vst.msk [vmem:[#allocation2] sm:$0xf] %vm418, %v413
    // Predicated region
    $region30: #{dqn_forward.1} parent=1 // pred_check
      _
    $region31: #{dqn_forward.1} parent=1 // pred_check_branch
      %421 = sbr.rel (0) target = $region33
    $region32: #{dqn_forward.1} parent=1 // pred_region
      %s423 = ssub.s32 64, 64
      %424 = vsyncadd [#allocation3], %s423
      %s426 = sshll.u32 [#allocation2], 4
      %s427 = int_to_ptr.vmem [resolvable:$true] %s426
      %429 = dma.vmem_to_hbm [thread:$0]  %s427, 64, %s7, [#allocation3]
    $region33: #{dqn_forward.1} parent=1 // pred_fallthru
      _
    // Predicated region
    $region34: #{dqn_forward.1} parent=1 // pred_check
      _
    $region35: #{dqn_forward.1} parent=1 // pred_check_branch
      %431 = sbr.rel (0) target = $region37
    $region36: #{dqn_forward.1} parent=1 // pred_region
      %432 = dma.done [#allocation3], 64
    $region37: #{dqn_forward.1} parent=1 // pred_fallthru
      _
    %433 = vsyncpa [#allocation3], 1

</llo_original>
